<compile_context>
chip_gen: v5e
topology: v5e:2x2
jax: 0.10.0
libtpu: 0.0.40
codegen_flags: <defaults>
</compile_context>

<pallas_src>
import numpy as np

import jax
import jax.numpy as jnp
from jax.experimental import pallas as pl
from jax.experimental.pallas import tpu as pltpu


def _round_up(x, m):
    return (x + m - 1) // m * m


def _vmem_capacity_bytes():
    """Physical per-core VMEM; fall back to the smallest current chip (64 MiB)."""
    try:
        return int(pltpu.get_tpu_info().vmem_capacity_bytes)
    except Exception:
        return 64 * 1024 * 1024


def _block_spec(shape, index_map, buffers=None):
    """BlockSpec with optional deeper pipelining; falls back to the default."""
    if buffers is not None and buffers != 2 and hasattr(pl, "Buffered"):
        try:
            return pl.BlockSpec(shape, index_map, pipeline_mode=pl.Buffered(buffers))
        except TypeError:
            pass
    return pl.BlockSpec(shape, index_map)


def _pick_tn(n_pad, target, c_pad, dsize, budget):
    """Largest 128-multiple tile that divides n_pad and fits the VMEM budget."""
    cand = min(max(_round_up(target, 128), 128), n_pad)
    best = 128
    while cand >= 128:
        step_bytes = c_pad * cand * (4 * dsize + 8) + 8 * c_pad * c_pad * 4
        if n_pad % cand == 0 and step_bytes <= budget:
            best = cand
            break
        cand -= 128
    return best


def _cam_softmax(energy, c_real, c_pad):
    """softmax(rowmax(E) - E) == exp(rowmin(E) - E) / rowsum(exp(rowmin(E) - E)).

    Padded columns (>= c_real) are masked to +inf so they carry zero weight.
    Exact division for the denominator: the (C, C) matrix is tiny, so the
    approximate reciprocal buys nothing and costs parity with the reference.
    """
    if c_pad > c_real:
        col = jax.lax.broadcasted_iota(jnp.int32, energy.shape, 1)
        energy = jnp.where(col < c_real, energy, jnp.inf)
    m = jnp.min(energy, axis=-1, keepdims=True)
    p = jnp.exp(m - energy)                            # padded cols -> exp(-inf) = 0
    return p / jnp.sum(p, axis=-1, keepdims=True)


def _cam_resident_call(x_flat, gamma, *, c_real, c_pad, n_pad, mm_dtype,
                       precision, vmem_limit, alias_io):
    """Whole (C_pad, N_pad) slab per batch element resident in VMEM (one HBM pass)."""
    B = x_flat.shape[0]
    dt = x_flat.dtype

    def kernel(gamma_ref, x_ref, o_ref):
        x = x_ref[0]                                             # (C_pad, N_pad)
        xm = x.astype(mm_dtype) if mm_dtype != x.dtype else x
        # energy = X @ X^T, contracting the last dims (no materialized transpose).
        energy = jax.lax.dot_general(
            xm, xm, dimension_numbers=(((1,), (1,)), ((), ())),
            preferred_element_type=jnp.float32, precision=precision)
        att = _cam_softmax(energy, c_real, c_pad).astype(mm_dtype)
        out = jnp.dot(att, xm, preferred_element_type=jnp.float32,
                      precision=precision)
        # Cast before the residual add: no full f32 copy of x in VMEM
        # (identical result for f32 inputs).
        o_ref[0] = (gamma_ref[0] * out).astype(o_ref.dtype) + x

    cost = pl.CostEstimate(
        flops=4 * B * c_pad * c_pad * n_pad,
        transcendentals=B * c_pad * c_pad,
        bytes_accessed=2 * B * c_pad * n_pad * dt.itemsize + 4,
    )
    return pl.pallas_call(
        kernel,
        out_shape=jax.ShapeDtypeStruct((B, c_pad, n_pad), dt),
        grid_spec=pltpu.PrefetchScalarGridSpec(
            num_scalar_prefetch=0,
            grid=(B,),
            in_specs=[
                pl.BlockSpec(memory_space=pltpu.MemorySpace.SMEM),      # gamma
                pl.BlockSpec((1, c_pad, n_pad), lambda b: (b, 0, 0)),   # x per batch
            ],
            out_specs=pl.BlockSpec((1, c_pad, n_pad), lambda b: (b, 0, 0)),
        ),
        compiler_params=pltpu.CompilerParams(
            dimension_semantics=("parallel",),
            vmem_limit_bytes=vmem_limit),
        cost_estimate=cost,
        input_output_aliases=({1: 0} if alias_io else {}),
    )(gamma, x_flat)


def _cam_streaming_call(x_flat, gamma, *, c_real, c_pad, n_pad, tn, mm_dtype,
                        precision, vmem_limit, buffers, alias_io):
    """Two-pass N-tiled path: small per-step VMEM, lane-dense (128-multiple) tiles."""
    B = x_flat.shape[0]
    dt = x_flat.dtype
    num_tiles = n_pad // tn

    # ---- pass 1: accumulate energy over N tiles, softmax at the last tile ----
    def energy_kernel(x_ref, att_ref, acc_ref):
        k = pl.program_id(1)

        @pl.when(k == 0)
        def _():
            acc_ref[...] = jnp.zeros_like(acc_ref)

        x = x_ref[0]                                             # (C_pad, tn)
        xm = x.astype(mm_dtype) if mm_dtype != x.dtype else x
        acc_ref[...] += jax.lax.dot_general(
            xm, xm, dimension_numbers=(((1,), (1,)), ((), ())),
            preferred_element_type=jnp.float32, precision=precision)

        @pl.when(k == pl.num_programs(1) - 1)
        def _():
            att_ref[0] = _cam_softmax(acc_ref[...], c_real, c_pad)

    # Attention kept in f32 through HBM so low-precision inputs do not degrade
    # the softmax weights between the two passes.
    att = pl.pallas_call(
        energy_kernel,
        out_shape=jax.ShapeDtypeStruct((B, c_pad, c_pad), jnp.float32),
        grid_spec=pltpu.PrefetchScalarGridSpec(
            num_scalar_prefetch=0,
            grid=(B, num_tiles),
            in_specs=[_block_spec((1, c_pad, tn), lambda b, k: (b, 0, k), buffers)],
            out_specs=pl.BlockSpec((1, c_pad, c_pad), lambda b, k: (b, 0, 0)),
            scratch_shapes=[pltpu.VMEM((c_pad, c_pad), jnp.float32)],
        ),
        compiler_params=pltpu.CompilerParams(
            dimension_semantics=("parallel", "arbitrary"),
            vmem_limit_bytes=vmem_limit),
        cost_estimate=pl.CostEstimate(
            flops=2 * B * c_pad * c_pad * n_pad,
            transcendentals=B * c_pad * c_pad,
            bytes_accessed=B * c_pad * n_pad * dt.itemsize
                           + B * c_pad * c_pad * 4),
    )(x_flat)
    # TODO(synk): on v7x with B == 1 this energy pass still runs on one
    # TensorCore; splitting its C rows over a second "parallel" axis (and
    # fusing the two passes into one grid with a phase axis) would use both.

    # ---- pass 2: out_tile = gamma * (attention @ x_tile) + x_tile ------------
    def apply_kernel(gamma_ref, att_ref, x_ref, o_ref):
        x = x_ref[0]                                             # (C_pad, tn)
        xm = x.astype(mm_dtype) if mm_dtype != x.dtype else x
        a = att_ref[0].astype(mm_dtype)
        out = jnp.dot(a, xm, preferred_element_type=jnp.float32,
                      precision=precision)
        o_ref[0] = (gamma_ref[0] * out).astype(o_ref.dtype) + x

    return pl.pallas_call(
        apply_kernel,
        out_shape=jax.ShapeDtypeStruct((B, c_pad, n_pad), dt),
        grid_spec=pltpu.PrefetchScalarGridSpec(
            num_scalar_prefetch=0,
            grid=(B, num_tiles),
            in_specs=[
                pl.BlockSpec(memory_space=pltpu.MemorySpace.SMEM),            # gamma
                pl.BlockSpec((1, c_pad, c_pad), lambda b, k: (b, 0, 0)),      # attention
                _block_spec((1, c_pad, tn), lambda b, k: (b, 0, k), buffers),  # x tile
            ],
            out_specs=pl.BlockSpec((1, c_pad, tn), lambda b, k: (b, 0, k)),
        ),
        compiler_params=pltpu.CompilerParams(
            dimension_semantics=("parallel", "parallel"),   # both independent (v7x 2 TCs)
            vmem_limit_bytes=vmem_limit),
        cost_estimate=pl.CostEstimate(
            flops=2 * B * c_pad * c_pad * n_pad,
            transcendentals=0,
            bytes_accessed=2 * B * c_pad * n_pad * dt.itemsize
                           + B * c_pad * c_pad * 4),
        input_output_aliases=({2: 0} if alias_io else {}),
    )(gamma, att, x_flat)


def cam_module_forward(x, gamma, *, n_tile=1024, matmul_dtype=None,
                       precision=None, max_resident_bytes=None,
                       vmem_limit_bytes=None, force_streaming=False,
                       stream_buffers=None, alias_io=False):
    """x: (B, C, H, W), gamma: (1,). Returns (B, C, H, W) == CAM_Module.forward.

    matmul_dtype: optional lower-precision MXU dtype (e.g. jnp.bfloat16) for the
    two matmuls; accumulation stays in f32.  precision: lax.Precision for the
    matmuls (None = XLA default).  stream_buffers=3 enables deeper pipelining of
    the streamed x tiles; alias_io=True aliases x into the output buffer.
    """
    B, C, H, W = x.shape
    N = H * W
    dt = x.dtype
    dsize = dt.itemsize
    mm_dtype = np.dtype(matmul_dtype) if matmul_dtype is not None else dt

    # dtype-aware sublane padding for C (8 f32 / 16 bf16 / 32 int8), and lane
    # padding for N to 128 only (a no-op for common spatial sizes).
    sublane = {4: 8, 2: 16, 1: 32}.get(dsize, 8)
    c_pad = _round_up(max(C, sublane), sublane)
    n_pad = _round_up(N, 128)

    x_flat = x.reshape(B, C, N)
    if c_pad != C or n_pad != N:
        x_flat = jnp.pad(x_flat, ((0, 0), (0, c_pad - C), (0, n_pad - N)))

    # Generation-aware VMEM budgeting: v5e/v6e (128 MiB physical) keep the
    # single-HBM-pass resident path for large C*N; v7x (64 MiB) caps lower and
    # falls back to streaming, which is cheap at 3.2 TB/s HBM.
    vmem_cap = _vmem_capacity_bytes()
    if vmem_limit_bytes is None:
        vmem_limit_bytes = (100 * 1024 * 1024 if vmem_cap >= 128 * 1024 * 1024
                            else int(vmem_cap * 0.65))
    if max_resident_bytes is None:
        max_resident_bytes = int(vmem_limit_bytes * 0.9)

    # Resident footprint: double-buffered in/out blocks, f32 matmul result +
    # epilogue temp, optional matmul-dtype copy, energy/softmax temporaries.
    slab = c_pad * n_pad
    resident_bytes = (4 * slab * dsize
                      + 2 * slab * 4
                      + (slab * mm_dtype.itemsize if mm_dtype != dt else 0)
                      + 6 * c_pad * c_pad * 4)

    use_resident = (not force_streaming) and resident_bytes <= max_resident_bytes
    # v7x-like chips (2 TensorCores, <128 MiB VMEM): with a single batch element
    # the resident grid=(B,) uses one core only -> prefer the streaming path,
    # whose apply pass has two "parallel" axes.
    if B < 2 and vmem_cap < 128 * 1024 * 1024 and n_pad // 128 >= 2:
        use_resident = False

    if use_resident:
        out_flat = _cam_resident_call(
            x_flat, gamma, c_real=C, c_pad=c_pad, n_pad=n_pad, mm_dtype=mm_dtype,
            precision=precision, vmem_limit=vmem_limit_bytes, alias_io=alias_io)
    else:
        tn = _pick_tn(n_pad, n_tile, c_pad, dsize,
                      budget=int(vmem_limit_bytes * 0.8))
        out_flat = _cam_streaming_call(
            x_flat, gamma, c_real=C, c_pad=c_pad, n_pad=n_pad, tn=tn,
            mm_dtype=mm_dtype, precision=precision, vmem_limit=vmem_limit_bytes,
            buffers=stream_buffers, alias_io=alias_io)

    return out_flat[:, :C, :N].reshape(B, C, H, W)


def cam_module_reference(x, gamma, precision=None):
    B, C, H, W = x.shape
    xf = x.reshape(B, C, H * W)
    energy = jnp.einsum('bcn,bdn->bcd', xf, xf, precision=precision)
    energy_new = jnp.max(energy, axis=-1, keepdims=True) - energy
    attention = jax.nn.softmax(energy_new, axis=-1)
    out = jnp.einsum('bcd,bdn->bcn', attention, xf,
                     precision=precision).reshape(B, C, H, W)
    return gamma[0] * out + x


if __name__ == "__main__":
    key = jax.random.PRNGKey(0)
    B, C, H, W = 2, 4, 16, 16
    x = jax.random.normal(key, (B, C, H, W), dtype=jnp.float32)

    # Parameter from __init__: gamma = Parameter(torch.zeros(1))
    gamma0 = jnp.zeros((1,), dtype=jnp.float32)
    gamma_nz = jnp.full((1,), 0.5, dtype=jnp.float32)

    # Pin matmul precision on BOTH sides so kernel vs. reference parity holds
    # regardless of where each executes (hardware MXU vs. interpret mode).
    PREC = jax.lax.Precision.HIGHEST

    ref0 = cam_module_reference(x, gamma0, precision=PREC)
    ref_nz = cam_module_reference(x, gamma_nz, precision=PREC)

    # Resident (single fused kernel) fast path — chosen automatically (fits VMEM).
    out0 = jax.block_until_ready(cam_module_forward(x, gamma0, precision=PREC))
    assert out0.shape == (B, C, H, W)
    assert jnp.allclose(out0, ref0, atol=1e-5, rtol=1e-5)

    # Nonzero gamma exercises the bmm/softmax/bmm hot path.
    out_nz = jax.block_until_ready(cam_module_forward(x, gamma_nz, precision=PREC))
    assert jnp.allclose(out_nz, ref_nz, atol=2e-3, rtol=2e-3), float(
        jnp.max(jnp.abs(out_nz - ref_nz)))

    # Streaming (two-pass, N-tiled) VMEM-safe path — forced here with 2 N tiles
    # so the energy accumulation + per-tile fused epilogue are exercised too.
    out_s = jax.block_until_ready(
        cam_module_forward(x, gamma_nz, force_streaming=True, n_tile=128,
                           precision=PREC))
    assert jnp.allclose(out_s, ref_nz, atol=2e-3, rtol=2e-3), float(
        jnp.max(jnp.abs(out_s - ref_nz)))

    print("KERNEL_OK")
</pallas_src>

<mosaic_0001>
module attributes {stable_mosaic.version = 11 : i64} {
  func.func @kernel(%arg0: i32, %arg1: memref<1xf32, #tpu.memory_space<smem>>, %arg2: memref<1x8x256xf32, #tpu.memory_space<vmem>>, %arg3: memref<1x8x256xf32, #tpu.memory_space<vmem>>) attributes {dimension_semantics = [#tpu.dimension_semantics<parallel>], iteration_bounds = array<i64: 2>, scalar_prefetch = 0 : i64, scratch_operands = 0 : i64, tpu.core_type = #tpu.core_type<tc>, window_params = [{transform_indices = @transform_0, window_bounds = array<i64: 1>}, {transform_indices = @transform_1, window_bounds = array<i64: 1, 8, 256>}, {transform_indices = @transform_2, window_bounds = array<i64: 1, 8, 256>}]} {
    %c0 = arith.constant 0 : index
    %c0_0 = arith.constant 0 : index
    %c0_1 = arith.constant 0 : index
    %0 = vector.load %arg2[%c0, %c0_0, %c0_1] : memref<1x8x256xf32, #tpu.memory_space<vmem>>, vector<1x8x256xf32>
    %1 = vector.shape_cast %0 : vector<1x8x256xf32> to vector<8x256xf32>
    %cst = arith.constant dense<0.000000e+00> : vector<8x8xf32>
    %2 = tpu.matmul %1, %1, %cst {dimension_numbers = #tpu.dot_dimension_numbers<[1], [1], [0], [0], [0, 0, 1, 0], [], []>, precision = #tpu.contract_precision<fp32>} : vector<8x256xf32>, vector<8x256xf32>, vector<8x8xf32> -> vector<8x8xf32>
    %3 = tpu.iota {dimensions = array<i32: 1>} : vector<8x8xi32>
    %c4_i32 = arith.constant 4 : i32
    %4 = vector.broadcast %c4_i32 : i32 to vector<8x8xi32>
    %5 = arith.cmpi slt, %3, %4 : vector<8x8xi32>
    %cst_2 = arith.constant 0x7F800000 : f32
    %6 = vector.broadcast %cst_2 : f32 to vector<8x8xf32>
    %7 = arith.select %5, %2, %6 : vector<8x8xi1>, vector<8x8xf32>
    %cst_3 = arith.constant dense<0x7F800000> : vector<8xf32>
    %8 = vector.multi_reduction <minimumf>, %7, %cst_3 [1] : vector<8x8xf32> to vector<8xf32>
    %9 = vector.shape_cast %8 : vector<8xf32> to vector<8x1xf32>
    %10 = vector.broadcast %9 : vector<8x1xf32> to vector<8x8xf32>
    %11 = arith.subf %10, %7 : vector<8x8xf32>
    %12 = math.exp %11 : vector<8x8xf32>
    %cst_4 = arith.constant dense<0.000000e+00> : vector<8xf32>
    %13 = vector.multi_reduction <add>, %12, %cst_4 [1] : vector<8x8xf32> to vector<8xf32>
    %14 = vector.shape_cast %13 : vector<8xf32> to vector<8x1xf32>
    %15 = vector.broadcast %14 : vector<8x1xf32> to vector<8x8xf32>
    %16 = arith.divf %12, %15 : vector<8x8xf32>
    %cst_5 = arith.constant dense<0.000000e+00> : vector<8x256xf32>
    %17 = tpu.matmul %16, %1, %cst_5 {dimension_numbers = #tpu.dot_dimension_numbers<[1], [0], [0], [1], [0, 0, 1, 1], [], []>, precision = #tpu.contract_precision<fp32>} : vector<8x8xf32>, vector<8x256xf32>, vector<8x256xf32> -> vector<8x256xf32>
    %c0_6 = arith.constant 0 : index
    %18 = memref.load %arg1[%c0_6] : memref<1xf32, #tpu.memory_space<smem>>
    %19 = vector.broadcast %18 : f32 to vector<8x256xf32>
    %20 = arith.mulf %19, %17 : vector<8x256xf32>
    %21 = arith.addf %20, %1 : vector<8x256xf32>
    %c0_7 = arith.constant 0 : index
    %c0_8 = arith.constant 0 : index
    %c0_9 = arith.constant 0 : index
    %22 = vector.load %arg3[%c0_7, %c0_8, %c0_9] : memref<1x8x256xf32, #tpu.memory_space<vmem>>, vector<1x8x256xf32>
    %23 = vector.shape_cast %22 : vector<1x8x256xf32> to vector<8x256xf32>
    %24 = vector.shape_cast %21 : vector<8x256xf32> to vector<1x8x256xf32>
    tpu.vector_store %arg3[%c0_7, %c0_8, %c0_9], %24 {strides = array<i32>} : memref<1x8x256xf32, #tpu.memory_space<vmem>>, vector<1x8x256xf32>,
    return
  }
  func.func @transform_0(%arg0: i32) -> i32 {
    %c0_i32 = arith.constant 0 : i32
    %c0_i32_0 = arith.constant 0 : i32
    return %c0_i32 : i32
  }
  func.func @transform_1(%arg0: i32) -> (i32, i32, i32) {
    %c0_i32 = arith.constant 0 : i32
    %c0_i32_0 = arith.constant 0 : i32
    %c0_i32_1 = arith.constant 0 : i32
    return %arg0, %c0_i32, %c0_i32_0 : i32, i32, i32
  }
  func.func @transform_2(%arg0: i32) -> (i32, i32, i32) {
    %c0_i32 = arith.constant 0 : i32
    %c0_i32_0 = arith.constant 0 : i32
    %c0_i32_1 = arith.constant 0 : i32
    return %arg0, %c0_i32, %c0_i32_0 : i32, i32, i32
  }
}

</mosaic_0001>

<llo_original>
// kernel: tpu_custom_call.1
$region0: #{tpu_custom_call.1}
  #allocation0 [shape = 'u32[]', space=smem, size = 0x4, offset = 0x4, fixed_abs, tag = 'smem constant byte address 0x4 - core index']
  #allocation1 [shape = 'u32[72,128]{1,0:T(1,128)}', space=vmem, size = 0x9000, scoped, tag = 'internal scratch']
  #allocation2 [shape = 'f32[1]{0:T(128)S(6)}', space=smem, size = 0x200, scoped, tag = 'scoped memory for tpu_custom_call.1']
  %s0 = inlined_call_operand.<no memory space> [shape: f32[1], index: 0, kind: input, shape index: {}]
  %s1 = inlined_call_operand.hbm [shape: f32[2,8,256], index: 1, kind: input, shape index: {}]
  %s2 = inlined_call_operand.hbm [shape: f32[2,8,256], index: 2, kind: output, shape index: {}]
  %s3 = sld [smem:[#allocation0]]
  $region45: #{tpu_custom_call.1} parent=0
    _
  %s5 = ssub.s32 1, %s3
  %s6 = scalar_select 0, %s5, %s3
  %7 = sst [smem:[#allocation2]] %s0
  $region1: #{tpu_custom_call.1} parent=0
    #allocation3 [shape = 'u8[16384]{0}', space=vmem, size = 0x4000, scoped, tag = 'input window, operand 1']
    #allocation4 [shape = 's32[2]{0}', space=sflag, size = 0x8, scoped, tag = 'scoped memory for tpu_custom_call.1']
    #allocation5 [shape = 's32[2]{0}', space=sflag, size = 0x8, scoped, tag = 'scoped memory for tpu_custom_call.1']
    #allocation6 [shape = 'u8[16384]{0}', space=vmem, size = 0x4000, scoped, tag = 'output window, operand 0']
    %8 = vsyncpa [#allocation4], 0
    %s9 = scalar_lea.sflag [#allocation4], 1
    %10 = vsyncpa %s9, 0
    %11 = vsyncpa [#allocation5], 0
    %s12 = scalar_lea.sflag [#allocation5], 1
    %13 = vsyncpa %s12, 0
    loop: start=0, step=1, limit=4
    $region2: #{tpu_custom_call.1} parent=1 // loop_pre_header
      _
    $region3: #{tpu_custom_call.1} parent=1 // loop_header
      %s15 = sphi 0, %s19
      %p16 = scmp.ge.s32.totalorder %s15, 4
      %s23 = sphi 0, %s23
      %s25 = sphi 0, %s23
      %s26 = sphi 0, %s25
      %s40 = sphi 0, %s26
      %s46 = sphi 0, %s48
      %s49 = sphi 0, %s46
      %s50 = sphi 0, %s49
      %s66 = sphi 0, %s50
      %s72 = sphi 0, %s74
      %s75 = sphi 0, %s72
      %s76 = sphi 0, %s75
      %s92 = sphi 0, %s76
    $region4: #{tpu_custom_call.1} parent=1 // loop_header_branch
      %18 = sbr.rel (%p16) target = $region8
    $region5: #{tpu_custom_call.1} parent=1 // loop_body
      %s20 = ssub.s32 %s15, 1
      %s21 = ssub.s32 %s15, 2
      %s22 = sadd.s32 %s15, 1
      %s24 = sadd.s32 %s23, 1
      %p27 = scmp.eq.s32.totalorder %s15, 1
      %p28 = scmp.ne.s32.totalorder %s23, %s25
      %p29 = scmp.eq.s32.totalorder %s15, 0
      %p30 = por %p28, %p29
      %p31 = scmp.ne.s32.totalorder %s23, %s25
      %p32 = scmp.eq.s32.totalorder %s20, 1
      %p33 = por %p31, %p32
      %p34 = scmp.ne.s32.totalorder %s25, %s26
      %p35 = scmp.eq.s32.totalorder %s20, 0
      %p36 = por %p34, %p35
      %p37 = scmp.ne.s32.totalorder %s25, %s26
      %p38 = scmp.eq.s32.totalorder %s21, 1
      %p39 = por %p37, %p38
      %p41 = scmp.ne.s32.totalorder %s26, %s40
      %p42 = scmp.eq.s32.totalorder %s21, 0
      %p43 = por %p41, %p42
      %s44 = ssub.s32 %s15, %s22
      %p45 = scmp.eq.s32.totalorder %s44, 0
      %s47 = sadd.s32 %s46, 1
      %s48 = scalar_select %p45, %s46, %s47
      %p51 = pneg %p45
      %p52 = scmp.eq.s32.totalorder %s15, 1
      %p53 = por %p51, %p52
      %p54 = scmp.ne.s32.totalorder %s46, %s49
      %p55 = scmp.eq.s32.totalorder %s15, 0
      %p56 = por %p54, %p55
      %p57 = scmp.ne.s32.totalorder %s46, %s49
      %p58 = scmp.eq.s32.totalorder %s20, 1
      %p59 = por %p57, %p58
      %p60 = scmp.ne.s32.totalorder %s49, %s50
      %p61 = scmp.eq.s32.totalorder %s20, 0
      %p62 = por %p60, %p61
      %p63 = scmp.ne.s32.totalorder %s49, %s50
      %p64 = scmp.eq.s32.totalorder %s21, 1
      %p65 = por %p63, %p64
      %p67 = scmp.ne.s32.totalorder %s50, %s66
      %p68 = scmp.eq.s32.totalorder %s21, 0
      %p69 = por %p67, %p68
      %s70 = ssub.s32 %s15, %s22
      %p71 = scmp.eq.s32.totalorder %s70, 0
      %s73 = sadd.s32 %s72, 1
      %s74 = scalar_select %p71, %s72, %s73
      %p77 = pneg %p71
      %p78 = scmp.eq.s32.totalorder %s15, 1
      %p79 = por %p77, %p78
      %p80 = scmp.ne.s32.totalorder %s72, %s75
      %p81 = scmp.eq.s32.totalorder %s15, 0
      %p82 = por %p80, %p81
      %p83 = scmp.ne.s32.totalorder %s72, %s75
      %p84 = scmp.eq.s32.totalorder %s20, 1
      %p85 = por %p83, %p84
      %p86 = scmp.ne.s32.totalorder %s75, %s76
      %p87 = scmp.eq.s32.totalorder %s20, 0
      %p88 = por %p86, %p87
      %p89 = scmp.ne.s32.totalorder %s75, %s76
      %p90 = scmp.eq.s32.totalorder %s21, 1
      %p91 = por %p89, %p90
      %p93 = scmp.ne.s32.totalorder %s76, %s92
      %p94 = scmp.eq.s32.totalorder %s21, 0
      %p95 = por %p93, %p94
      %p96 = scmp.le.s32.totalorder 1, %s15
      %p97 = scmp.lt.s32.totalorder %s15, 3
      %p98 = pnand %p96, %p97
      %p99 = pneg %p98
      // Predicated region
      $region9: #{tpu_custom_call.1} parent=5 // pred_check
        _
      $region10: #{tpu_custom_call.1} parent=5 // pred_check_branch
        %101 = sbr.rel (%p98) target = $region12
      $region11: #{tpu_custom_call.1} parent=5 // pred_region
        %s102 = ssub.s32 %s15, 1
        // Predicated region
        $region13: #{tpu_custom_call.1} parent=11 // pred_check
          %p103 = pneg %p36
        $region14: #{tpu_custom_call.1} parent=11 // pred_check_branch
          %105 = sbr.rel (%p103) target = $region16
        $region15: #{tpu_custom_call.1} parent=11 // pred_region
          _
        $region16: #{tpu_custom_call.1} parent=11 // pred_fallthru
          _
      $region12: #{tpu_custom_call.1} parent=5 // pred_fallthru
        _
      %p106 = scmp.lt.s32.totalorder %s15, 2
      // Predicated region
      $region17: #{tpu_custom_call.1} parent=5 // pred_check
        %p107 = pneg %p106
      $region18: #{tpu_custom_call.1} parent=5 // pred_check_branch
        %109 = sbr.rel (%p107) target = $region20
      $region19: #{tpu_custom_call.1} parent=5 // pred_region
        // Predicated region
        $region21: #{tpu_custom_call.1} parent=19 // pred_check
          %p110 = pneg %p56
        $region22: #{tpu_custom_call.1} parent=19 // pred_check_branch
          %112 = sbr.rel (%p110) target = $region24
        $region23: #{tpu_custom_call.1} parent=19 // pred_region
          %s113 = sand.u32 %s46, 1
          %s114 = scalar_lea.sflag [#allocation4], %s113
          %s115 = sand.u32 %s46, 1
          %s116 = smul.addr %s115, 16
          %s117 = scalar_lea.vmem [#allocation3], %s116
          %119 = vsyncadd %s114, 0
          %s120 = smul.addr %s15, 2
          %s121 = smul.addr %s120, 8
          %s122 = scalar_lea.hbm %s1, %s121
          %s124 = sshll.u32 %s122, 4
          %s125 = int_to_ptr.hbm [resolvable:$true] %s124
          %s126 = sshll.u32 %s117, 4
          %s127 = int_to_ptr.vmem [resolvable:$true] %s126
          %129 = dma.hbm_to_vmem [thread:$0]  %s125, 256, %s127, %s114
        $region24: #{tpu_custom_call.1} parent=19 // pred_fallthru
          _
      $region20: #{tpu_custom_call.1} parent=5 // pred_fallthru
        _
      %p130 = scmp.le.s32.totalorder 1, %s15
      %p131 = scmp.lt.s32.totalorder %s15, 3
      %p132 = pnand %p130, %p131
      %p133 = pneg %p132
      // Predicated region
      $region25: #{tpu_custom_call.1} parent=5 // pred_check
        _
      $region26: #{tpu_custom_call.1} parent=5 // pred_check_branch
        %135 = sbr.rel (%p132) target = $region28
      $region27: #{tpu_custom_call.1} parent=5 // pred_region
        %s136 = ssub.s32 %s15, 1
        %s137 = sand.u32 %s49, 1
        %s138 = scalar_lea.sflag [#allocation4], %s137
        %s139 = sand.u32 %s49, 1
        %s140 = smul.addr %s139, 16
        %s141 = scalar_lea.vmem [#allocation3], %s140
        // Predicated region
        $region29: #{tpu_custom_call.1} parent=27 // pred_check
          %p142 = pneg %p62
        $region30: #{tpu_custom_call.1} parent=27 // pred_check_branch
          %144 = sbr.rel (%p142) target = $region32
        $region31: #{tpu_custom_call.1} parent=27 // pred_region
          %146 = dma.done %s138, 256
        $region32: #{tpu_custom_call.1} parent=27 // pred_fallthru
          _
        %p147 = pneg %p36
        %p148 = pneg %p33
        %s149 = sand.u32 %s49, 1
        %s150 = scalar_lea.sflag [#allocation4], %s149
        %s151 = sand.u32 %s49, 1
        %s152 = smul.addr %s151, 16
        %s153 = scalar_lea.vmem [#allocation3], %s152
        %p154 = pneg %p62
        %p155 = pneg %p59
        %p156 = pneg %p88
        %p157 = pneg %p85
        %s158 = sand.u32 %s75, 1
        %s159 = scalar_lea.sflag [#allocation5], %s158
        %s160 = sand.u32 %s75, 1
        %s161 = smul.addr %s160, 16
        %s162 = scalar_lea.vmem [#allocation6], %s161
        %v163 = vld [vmem:[%s141] sm:$0xff]
        %v164 = vld [vmem:[%s141 + $0x8] sm:$0xff]
        %165 = vmatpush.xpose.msra.mxu0 0.0
        %166 = vmatpush.xpose.msra.mxu0 0.0
        %167 = vmatpush.xpose.msra.mxu0 0.0
        %168 = vmatpush.xpose.msra.mxu0 0.0
        %169 = vmatpush.xpose.msra.mxu0 0.0
        %170 = vmatpush.xpose.msra.mxu0 0.0
        %171 = vmatpush.xpose.msra.mxu0 0.0
        %172 = vmatpush.xpose.msra.mxu0 0.0
        %173 = vmatpush.xpose.msra.mxu0 0.0
        %174 = vmatpush.xpose.msra.mxu0 0.0
        %175 = vmatpush.xpose.msra.mxu0 0.0
        %176 = vmatpush.xpose.msra.mxu0 0.0
        %177 = vmatpush.xpose.msra.mxu0 0.0
        %178 = vmatpush.xpose.msra.mxu0 0.0
        %179 = vmatpush.xpose.msra.mxu0 0.0
        %v180 = vand.u32 %v163, 4294901760
        %181 = vmatpush.xpose.msra.mxu0 %v180
        %v182 = vand.u32 %v163, 4294901760
        %v183 = vsub.f32 %v163, %v182
        %v184 = vand.u32 %v183, 4294901760
        %v185 = vsub.f32 %v183, %v184
        %v186 = vand.u32 %v185, 4294901760
        %187 = vmatmul.f32.gmra.mxu0 %v186
        %v188 = vpop.f32.mrf.mxu0
        %v189 = vadd.f32 0.0, %v188
        %190 = vdwg.mxu0
        %191 = vmatpush.xpose.msra.mxu0 0.0
        %192 = vmatpush.xpose.msra.mxu0 0.0
        %193 = vmatpush.xpose.msra.mxu0 0.0
        %194 = vmatpush.xpose.msra.mxu0 0.0
        %195 = vmatpush.xpose.msra.mxu0 0.0
        %196 = vmatpush.xpose.msra.mxu0 0.0
        %197 = vmatpush.xpose.msra.mxu0 0.0
        %198 = vmatpush.xpose.msra.mxu0 0.0
        %199 = vmatpush.xpose.msra.mxu0 0.0
        %200 = vmatpush.xpose.msra.mxu0 0.0
        %201 = vmatpush.xpose.msra.mxu0 0.0
        %202 = vmatpush.xpose.msra.mxu0 0.0
        %203 = vmatpush.xpose.msra.mxu0 0.0
        %204 = vmatpush.xpose.msra.mxu0 0.0
        %205 = vmatpush.xpose.msra.mxu0 0.0
        %v206 = vand.u32 %v163, 4294901760
        %v207 = vsub.f32 %v163, %v206
        %v208 = vand.u32 %v207, 4294901760
        %v209 = vsub.f32 %v207, %v208
        %v210 = vand.u32 %v209, 4294901760
        %211 = vmatpush.xpose.msra.mxu0 %v210
        %v212 = vand.u32 %v163, 4294901760
        %213 = vmatmul.f32.gmra.mxu0 %v212
        %v214 = vpop.f32.mrf.mxu0
        %v215 = vadd.f32 %v189, %v214
        %216 = vdwg.mxu0
        %217 = vmatpush.xpose.msra.mxu0 0.0
        %218 = vmatpush.xpose.msra.mxu0 0.0
        %219 = vmatpush.xpose.msra.mxu0 0.0
        %220 = vmatpush.xpose.msra.mxu0 0.0
        %221 = vmatpush.xpose.msra.mxu0 0.0
        %222 = vmatpush.xpose.msra.mxu0 0.0
        %223 = vmatpush.xpose.msra.mxu0 0.0
        %224 = vmatpush.xpose.msra.mxu0 0.0
        %225 = vmatpush.xpose.msra.mxu0 0.0
        %226 = vmatpush.xpose.msra.mxu0 0.0
        %227 = vmatpush.xpose.msra.mxu0 0.0
        %228 = vmatpush.xpose.msra.mxu0 0.0
        %229 = vmatpush.xpose.msra.mxu0 0.0
        %230 = vmatpush.xpose.msra.mxu0 0.0
        %231 = vmatpush.xpose.msra.mxu0 0.0
        %v232 = vand.u32 %v163, 4294901760
        %v233 = vsub.f32 %v163, %v232
        %234 = vmatpush.xpose.msra.mxu0 %v233
        %v235 = vand.u32 %v163, 4294901760
        %v236 = vsub.f32 %v163, %v235
        %237 = vmatmul.f32.gmra.mxu0 %v236
        %v238 = vpop.f32.mrf.mxu0
        %v239 = vadd.f32 %v215, %v238
        %240 = vdwg.mxu0
        %241 = vmatpush.xpose.msra.mxu0 0.0
        %242 = vmatpush.xpose.msra.mxu0 0.0
        %243 = vmatpush.xpose.msra.mxu0 0.0
        %244 = vmatpush.xpose.msra.mxu0 0.0
        %245 = vmatpush.xpose.msra.mxu0 0.0
        %246 = vmatpush.xpose.msra.mxu0 0.0
        %247 = vmatpush.xpose.msra.mxu0 0.0
        %248 = vmatpush.xpose.msra.mxu0 0.0
        %249 = vmatpush.xpose.msra.mxu0 0.0
        %250 = vmatpush.xpose.msra.mxu0 0.0
        %251 = vmatpush.xpose.msra.mxu0 0.0
        %252 = vmatpush.xpose.msra.mxu0 0.0
        %253 = vmatpush.xpose.msra.mxu0 0.0
        %254 = vmatpush.xpose.msra.mxu0 0.0
        %255 = vmatpush.xpose.msra.mxu0 0.0
        %v256 = vand.u32 %v163, 4294901760
        %257 = vmatpush.xpose.msra.mxu0 %v256
        %v258 = vand.u32 %v163, 4294901760
        %v259 = vsub.f32 %v163, %v258
        %v260 = vand.u32 %v259, 4294901760
        %261 = vmatmul.f32.gmra.mxu0 %v260
        %v262 = vpop.f32.mrf.mxu0
        %v263 = vadd.f32 %v239, %v262
        %264 = vdwg.mxu0
        %265 = vmatpush.xpose.msra.mxu0 0.0
        %266 = vmatpush.xpose.msra.mxu0 0.0
        %267 = vmatpush.xpose.msra.mxu0 0.0
        %268 = vmatpush.xpose.msra.mxu0 0.0
        %269 = vmatpush.xpose.msra.mxu0 0.0
        %270 = vmatpush.xpose.msra.mxu0 0.0
        %271 = vmatpush.xpose.msra.mxu0 0.0
        %272 = vmatpush.xpose.msra.mxu0 0.0
        %273 = vmatpush.xpose.msra.mxu0 0.0
        %274 = vmatpush.xpose.msra.mxu0 0.0
        %275 = vmatpush.xpose.msra.mxu0 0.0
        %276 = vmatpush.xpose.msra.mxu0 0.0
        %277 = vmatpush.xpose.msra.mxu0 0.0
        %278 = vmatpush.xpose.msra.mxu0 0.0
        %279 = vmatpush.xpose.msra.mxu0 0.0
        %v280 = vand.u32 %v163, 4294901760
        %v281 = vsub.f32 %v163, %v280
        %v282 = vand.u32 %v281, 4294901760
        %283 = vmatpush.xpose.msra.mxu0 %v282
        %v284 = vand.u32 %v163, 4294901760
        %285 = vmatmul.f32.gmra.mxu0 %v284
        %v286 = vpop.f32.mrf.mxu0
        %v287 = vadd.f32 %v263, %v286
        %288 = vdwg.mxu0
        %289 = vmatpush.xpose.msra.mxu0 0.0
        %290 = vmatpush.xpose.msra.mxu0 0.0
        %291 = vmatpush.xpose.msra.mxu0 0.0
        %292 = vmatpush.xpose.msra.mxu0 0.0
        %293 = vmatpush.xpose.msra.mxu0 0.0
        %294 = vmatpush.xpose.msra.mxu0 0.0
        %295 = vmatpush.xpose.msra.mxu0 0.0
        %296 = vmatpush.xpose.msra.mxu0 0.0
        %297 = vmatpush.xpose.msra.mxu0 0.0
        %298 = vmatpush.xpose.msra.mxu0 0.0
        %299 = vmatpush.xpose.msra.mxu0 0.0
        %300 = vmatpush.xpose.msra.mxu0 0.0
        %301 = vmatpush.xpose.msra.mxu0 0.0
        %302 = vmatpush.xpose.msra.mxu0 0.0
        %303 = vmatpush.xpose.msra.mxu0 0.0
        %v304 = vand.u32 %v163, 4294901760
        %305 = vmatpush.xpose.msra.mxu0 %v304
        %v306 = vand.u32 %v163, 4294901760
        %307 = vmatmul.f32.gmra.mxu0 %v306
        %v308 = vpop.f32.mrf.mxu0
        %v309 = vadd.f32 %v287, %v308
        %310 = vdwg.mxu0
        %311 = vmatpush.xpose.msra.mxu0 0.0
        %312 = vmatpush.xpose.msra.mxu0 0.0
        %313 = vmatpush.xpose.msra.mxu0 0.0
        %314 = vmatpush.xpose.msra.mxu0 0.0
        %315 = vmatpush.xpose.msra.mxu0 0.0
        %316 = vmatpush.xpose.msra.mxu0 0.0
        %317 = vmatpush.xpose.msra.mxu0 0.0
        %318 = vmatpush.xpose.msra.mxu0 0.0
        %319 = vmatpush.xpose.msra.mxu0 0.0
        %320 = vmatpush.xpose.msra.mxu0 0.0
        %321 = vmatpush.xpose.msra.mxu0 0.0
        %322 = vmatpush.xpose.msra.mxu0 0.0
        %323 = vmatpush.xpose.msra.mxu0 0.0
        %324 = vmatpush.xpose.msra.mxu0 0.0
        %325 = vmatpush.xpose.msra.mxu0 0.0
        %v326 = vand.u32 %v164, 4294901760
        %327 = vmatpush.xpose.msra.mxu0 %v326
        %v328 = vand.u32 %v164, 4294901760
        %v329 = vsub.f32 %v164, %v328
        %v330 = vand.u32 %v329, 4294901760
        %v331 = vsub.f32 %v329, %v330
        %v332 = vand.u32 %v331, 4294901760
        %333 = vmatmul.f32.gmra.mxu0 %v332
        %v334 = vpop.f32.mrf.mxu0
        %v335 = vadd.f32 %v309, %v334
        %336 = vdwg.mxu0
        %337 = vmatpush.xpose.msra.mxu0 0.0
        %338 = vmatpush.xpose.msra.mxu0 0.0
        %339 = vmatpush.xpose.msra.mxu0 0.0
        %340 = vmatpush.xpose.msra.mxu0 0.0
        %341 = vmatpush.xpose.msra.mxu0 0.0
        %342 = vmatpush.xpose.msra.mxu0 0.0
        %343 = vmatpush.xpose.msra.mxu0 0.0
        %344 = vmatpush.xpose.msra.mxu0 0.0
        %345 = vmatpush.xpose.msra.mxu0 0.0
        %346 = vmatpush.xpose.msra.mxu0 0.0
        %347 = vmatpush.xpose.msra.mxu0 0.0
        %348 = vmatpush.xpose.msra.mxu0 0.0
        %349 = vmatpush.xpose.msra.mxu0 0.0
        %350 = vmatpush.xpose.msra.mxu0 0.0
        %351 = vmatpush.xpose.msra.mxu0 0.0
        %v352 = vand.u32 %v164, 4294901760
        %v353 = vsub.f32 %v164, %v352
        %v354 = vand.u32 %v353, 4294901760
        %v355 = vsub.f32 %v353, %v354
        %v356 = vand.u32 %v355, 4294901760
        %357 = vmatpush.xpose.msra.mxu0 %v356
        %v358 = vand.u32 %v164, 4294901760
        %359 = vmatmul.f32.gmra.mxu0 %v358
        %v360 = vpop.f32.mrf.mxu0
        %v361 = vadd.f32 %v335, %v360
        %362 = vdwg.mxu0
        %363 = vmatpush.xpose.msra.mxu0 0.0
        %364 = vmatpush.xpose.msra.mxu0 0.0
        %365 = vmatpush.xpose.msra.mxu0 0.0
        %366 = vmatpush.xpose.msra.mxu0 0.0
        %367 = vmatpush.xpose.msra.mxu0 0.0
        %368 = vmatpush.xpose.msra.mxu0 0.0
        %369 = vmatpush.xpose.msra.mxu0 0.0
        %370 = vmatpush.xpose.msra.mxu0 0.0
        %371 = vmatpush.xpose.msra.mxu0 0.0
        %372 = vmatpush.xpose.msra.mxu0 0.0
        %373 = vmatpush.xpose.msra.mxu0 0.0
        %374 = vmatpush.xpose.msra.mxu0 0.0
        %375 = vmatpush.xpose.msra.mxu0 0.0
        %376 = vmatpush.xpose.msra.mxu0 0.0
        %377 = vmatpush.xpose.msra.mxu0 0.0
        %v378 = vand.u32 %v164, 4294901760
        %v379 = vsub.f32 %v164, %v378
        %380 = vmatpush.xpose.msra.mxu0 %v379
        %v381 = vand.u32 %v164, 4294901760
        %v382 = vsub.f32 %v164, %v381
        %383 = vmatmul.f32.gmra.mxu0 %v382
        %v384 = vpop.f32.mrf.mxu0
        %v385 = vadd.f32 %v361, %v384
        %386 = vdwg.mxu0
        %387 = vmatpush.xpose.msra.mxu0 0.0
        %388 = vmatpush.xpose.msra.mxu0 0.0
        %389 = vmatpush.xpose.msra.mxu0 0.0
        %390 = vmatpush.xpose.msra.mxu0 0.0
        %391 = vmatpush.xpose.msra.mxu0 0.0
        %392 = vmatpush.xpose.msra.mxu0 0.0
        %393 = vmatpush.xpose.msra.mxu0 0.0
        %394 = vmatpush.xpose.msra.mxu0 0.0
        %395 = vmatpush.xpose.msra.mxu0 0.0
        %396 = vmatpush.xpose.msra.mxu0 0.0
        %397 = vmatpush.xpose.msra.mxu0 0.0
        %398 = vmatpush.xpose.msra.mxu0 0.0
        %399 = vmatpush.xpose.msra.mxu0 0.0
        %400 = vmatpush.xpose.msra.mxu0 0.0
        %401 = vmatpush.xpose.msra.mxu0 0.0
        %v402 = vand.u32 %v164, 4294901760
        %403 = vmatpush.xpose.msra.mxu0 %v402
        %v404 = vand.u32 %v164, 4294901760
        %v405 = vsub.f32 %v164, %v404
        %v406 = vand.u32 %v405, 4294901760
        %407 = vmatmul.f32.gmra.mxu0 %v406
        %v408 = vpop.f32.mrf.mxu0
        %v409 = vadd.f32 %v385, %v408
        %410 = vdwg.mxu0
        %411 = vmatpush.xpose.msra.mxu0 0.0
        %412 = vmatpush.xpose.msra.mxu0 0.0
        %413 = vmatpush.xpose.msra.mxu0 0.0
        %414 = vmatpush.xpose.msra.mxu0 0.0
        %415 = vmatpush.xpose.msra.mxu0 0.0
        %416 = vmatpush.xpose.msra.mxu0 0.0
        %417 = vmatpush.xpose.msra.mxu0 0.0
        %418 = vmatpush.xpose.msra.mxu0 0.0
        %419 = vmatpush.xpose.msra.mxu0 0.0
        %420 = vmatpush.xpose.msra.mxu0 0.0
        %421 = vmatpush.xpose.msra.mxu0 0.0
        %422 = vmatpush.xpose.msra.mxu0 0.0
        %423 = vmatpush.xpose.msra.mxu0 0.0
        %424 = vmatpush.xpose.msra.mxu0 0.0
        %425 = vmatpush.xpose.msra.mxu0 0.0
        %v426 = vand.u32 %v164, 4294901760
        %v427 = vsub.f32 %v164, %v426
        %v428 = vand.u32 %v427, 4294901760
        %429 = vmatpush.xpose.msra.mxu0 %v428
        %v430 = vand.u32 %v164, 4294901760
        %431 = vmatmul.f32.gmra.mxu0 %v430
        %v432 = vpop.f32.mrf.mxu0
        %v433 = vadd.f32 %v409, %v432
        %434 = vdwg.mxu0
        %435 = vmatpush.xpose.msra.mxu0 0.0
        %436 = vmatpush.xpose.msra.mxu0 0.0
        %437 = vmatpush.xpose.msra.mxu0 0.0
        %438 = vmatpush.xpose.msra.mxu0 0.0
        %439 = vmatpush.xpose.msra.mxu0 0.0
        %440 = vmatpush.xpose.msra.mxu0 0.0
        %441 = vmatpush.xpose.msra.mxu0 0.0
        %442 = vmatpush.xpose.msra.mxu0 0.0
        %443 = vmatpush.xpose.msra.mxu0 0.0
        %444 = vmatpush.xpose.msra.mxu0 0.0
        %445 = vmatpush.xpose.msra.mxu0 0.0
        %446 = vmatpush.xpose.msra.mxu0 0.0
        %447 = vmatpush.xpose.msra.mxu0 0.0
        %448 = vmatpush.xpose.msra.mxu0 0.0
        %449 = vmatpush.xpose.msra.mxu0 0.0
        %v450 = vand.u32 %v164, 4294901760
        %451 = vmatpush.xpose.msra.mxu0 %v450
        %v452 = vand.u32 %v164, 4294901760
        %453 = vmatmul.f32.gmra.mxu0 %v452
        %v454 = vpop.f32.mrf.mxu0
        %v455 = vadd.f32 %v433, %v454
        %456 = vdwg.mxu0
        %v457 = vlaneseq
        %v458 = vand.u32 %v457, 127
        %vm459 = vcmp.lt.s32.totalorder %v458, 4
        %v460 = vsel %vm459, %v455, inf
        %vm461 = vcmask 64512
        %v462 = vsel %vm461, %v460, inf
        %463 = vmin.xlane.f32.xlu0 %v462
        %v464 = vpop.xlane.xlu0 %463
        %v465 = vsub.f32 %v464, %v460
        %v466 = vmul.f32 %v465, 1.442695
        %v467 = vpow.pop %v466
        %v468 = vsel %vm461, %v467, 0.0
        %469 = vadd.xlane.f32.xlu0 %v468
        %v470 = vpop.xlane.xlu0 %469
        %v471 = vrcp.pop %v470
        %v472 = vmul.f32 %v470, %v471
        %v473 = vsub.f32 1.0, %v472
        %v474 = vmul.f32 %v471, %v473
        %v475 = vadd.f32 %v471, %v474
        %vm476 = vweird.f32 %v470
        %vm477 = vweird.f32 %v471
        %vm478 = vmor %vm476, %vm477
        %v479 = vsel %vm478, %v471, %v475
        %v480 = vand.u32 2147483647, %v470
        %vm481 = vcmp.eq.f32.partialorder %v480, 8.507059e+37
        %v482 = vand.u32 %v470, 2147483648
        %v483 = vor.u32 1.1754944e-38, %v482
        %v484 = vsel %vm481, %v483, %v479
        %v485 = vmul.f32 %v467, %v484
        %v487 = vsel %vm461, %v485, 0
        %489 = vmatpush.msra.mxu0 0.0
        %490 = vmatpush.msra.mxu0 0.0
        %491 = vmatpush.msra.mxu0 0.0
        %492 = vmatpush.msra.mxu0 0.0
        %493 = vmatpush.msra.mxu0 0.0
        %494 = vmatpush.msra.mxu0 0.0
        %495 = vmatpush.msra.mxu0 0.0
        %496 = vmatpush.msra.mxu0 0.0
        %497 = vmatpush.msra.mxu0 0.0
        %498 = vmatpush.msra.mxu0 0.0
        %499 = vmatpush.msra.mxu0 0.0
        %500 = vmatpush.msra.mxu0 0.0
        %501 = vmatpush.msra.mxu0 0.0
        %502 = vmatpush.msra.mxu0 0.0
        %503 = vmatpush.msra.mxu0 0.0
        %v504 = vand.u32 %v163, 4294901760
        %505 = vmatpush.msra.mxu0 %v504
        %v506 = vand.u32 %v487, 4294901760
        %v507 = vsub.f32 %v487, %v506
        %v508 = vand.u32 %v507, 4294901760
        %v509 = vsub.f32 %v507, %v508
        %v510 = vand.u32 %v509, 4294901760
        %511 = vmatmul.f32.gmra.mxu0 %v510
        %v512 = vpop.f32.mrf.mxu0
        %v513 = vadd.f32 0.0, %v512
        %514 = vdwg.mxu0
        %515 = vmatpush.msra.mxu0 0.0
        %516 = vmatpush.msra.mxu0 0.0
        %517 = vmatpush.msra.mxu0 0.0
        %518 = vmatpush.msra.mxu0 0.0
        %519 = vmatpush.msra.mxu0 0.0
        %520 = vmatpush.msra.mxu0 0.0
        %521 = vmatpush.msra.mxu0 0.0
        %522 = vmatpush.msra.mxu0 0.0
        %523 = vmatpush.msra.mxu0 0.0
        %524 = vmatpush.msra.mxu0 0.0
        %525 = vmatpush.msra.mxu0 0.0
        %526 = vmatpush.msra.mxu0 0.0
        %527 = vmatpush.msra.mxu0 0.0
        %528 = vmatpush.msra.mxu0 0.0
        %529 = vmatpush.msra.mxu0 0.0
        %v530 = vand.u32 %v163, 4294901760
        %v531 = vsub.f32 %v163, %v530
        %v532 = vand.u32 %v531, 4294901760
        %v533 = vsub.f32 %v531, %v532
        %v534 = vand.u32 %v533, 4294901760
        %535 = vmatpush.msra.mxu0 %v534
        %v536 = vand.u32 %v487, 4294901760
        %537 = vmatmul.f32.gmra.mxu0 %v536
        %v538 = vpop.f32.mrf.mxu0
        %v539 = vadd.f32 %v513, %v538
        %540 = vdwg.mxu0
        %541 = vmatpush.msra.mxu0 0.0
        %542 = vmatpush.msra.mxu0 0.0
        %543 = vmatpush.msra.mxu0 0.0
        %544 = vmatpush.msra.mxu0 0.0
        %545 = vmatpush.msra.mxu0 0.0
        %546 = vmatpush.msra.mxu0 0.0
        %547 = vmatpush.msra.mxu0 0.0
        %548 = vmatpush.msra.mxu0 0.0
        %549 = vmatpush.msra.mxu0 0.0
        %550 = vmatpush.msra.mxu0 0.0
        %551 = vmatpush.msra.mxu0 0.0
        %552 = vmatpush.msra.mxu0 0.0
        %553 = vmatpush.msra.mxu0 0.0
        %554 = vmatpush.msra.mxu0 0.0
        %555 = vmatpush.msra.mxu0 0.0
        %v556 = vand.u32 %v163, 4294901760
        %v557 = vsub.f32 %v163, %v556
        %558 = vmatpush.msra.mxu0 %v557
        %v559 = vand.u32 %v487, 4294901760
        %v560 = vsub.f32 %v487, %v559
        %561 = vmatmul.f32.gmra.mxu0 %v560
        %v562 = vpop.f32.mrf.mxu0
        %v563 = vadd.f32 %v539, %v562
        %564 = vdwg.mxu0
        %565 = vmatpush.msra.mxu0 0.0
        %566 = vmatpush.msra.mxu0 0.0
        %567 = vmatpush.msra.mxu0 0.0
        %568 = vmatpush.msra.mxu0 0.0
        %569 = vmatpush.msra.mxu0 0.0
        %570 = vmatpush.msra.mxu0 0.0
        %571 = vmatpush.msra.mxu0 0.0
        %572 = vmatpush.msra.mxu0 0.0
        %573 = vmatpush.msra.mxu0 0.0
        %574 = vmatpush.msra.mxu0 0.0
        %575 = vmatpush.msra.mxu0 0.0
        %576 = vmatpush.msra.mxu0 0.0
        %577 = vmatpush.msra.mxu0 0.0
        %578 = vmatpush.msra.mxu0 0.0
        %579 = vmatpush.msra.mxu0 0.0
        %v580 = vand.u32 %v163, 4294901760
        %581 = vmatpush.msra.mxu0 %v580
        %v582 = vand.u32 %v487, 4294901760
        %v583 = vsub.f32 %v487, %v582
        %v584 = vand.u32 %v583, 4294901760
        %585 = vmatmul.f32.gmra.mxu0 %v584
        %v586 = vpop.f32.mrf.mxu0
        %v587 = vadd.f32 %v563, %v586
        %588 = vdwg.mxu0
        %589 = vmatpush.msra.mxu0 0.0
        %590 = vmatpush.msra.mxu0 0.0
        %591 = vmatpush.msra.mxu0 0.0
        %592 = vmatpush.msra.mxu0 0.0
        %593 = vmatpush.msra.mxu0 0.0
        %594 = vmatpush.msra.mxu0 0.0
        %595 = vmatpush.msra.mxu0 0.0
        %596 = vmatpush.msra.mxu0 0.0
        %597 = vmatpush.msra.mxu0 0.0
        %598 = vmatpush.msra.mxu0 0.0
        %599 = vmatpush.msra.mxu0 0.0
        %600 = vmatpush.msra.mxu0 0.0
        %601 = vmatpush.msra.mxu0 0.0
        %602 = vmatpush.msra.mxu0 0.0
        %603 = vmatpush.msra.mxu0 0.0
        %v604 = vand.u32 %v163, 4294901760
        %v605 = vsub.f32 %v163, %v604
        %v606 = vand.u32 %v605, 4294901760
        %607 = vmatpush.msra.mxu0 %v606
        %v608 = vand.u32 %v487, 4294901760
        %609 = vmatmul.f32.gmra.mxu0 %v608
        %v610 = vpop.f32.mrf.mxu0
        %v611 = vadd.f32 %v587, %v610
        %612 = vdwg.mxu0
        %613 = vmatpush.msra.mxu0 0.0
        %614 = vmatpush.msra.mxu0 0.0
        %615 = vmatpush.msra.mxu0 0.0
        %616 = vmatpush.msra.mxu0 0.0
        %617 = vmatpush.msra.mxu0 0.0
        %618 = vmatpush.msra.mxu0 0.0
        %619 = vmatpush.msra.mxu0 0.0
        %620 = vmatpush.msra.mxu0 0.0
        %621 = vmatpush.msra.mxu0 0.0
        %622 = vmatpush.msra.mxu0 0.0
        %623 = vmatpush.msra.mxu0 0.0
        %624 = vmatpush.msra.mxu0 0.0
        %625 = vmatpush.msra.mxu0 0.0
        %626 = vmatpush.msra.mxu0 0.0
        %627 = vmatpush.msra.mxu0 0.0
        %v628 = vand.u32 %v163, 4294901760
        %629 = vmatpush.msra.mxu0 %v628
        %v630 = vand.u32 %v487, 4294901760
        %631 = vmatmul.f32.gmra.mxu0 %v630
        %v632 = vpop.f32.mrf.mxu0
        %v633 = vadd.f32 %v611, %v632
        %634 = vdwg.mxu0
        %635 = vmatpush.msra.mxu0 0.0
        %636 = vmatpush.msra.mxu0 0.0
        %637 = vmatpush.msra.mxu0 0.0
        %638 = vmatpush.msra.mxu0 0.0
        %639 = vmatpush.msra.mxu0 0.0
        %640 = vmatpush.msra.mxu0 0.0
        %641 = vmatpush.msra.mxu0 0.0
        %642 = vmatpush.msra.mxu0 0.0
        %643 = vmatpush.msra.mxu0 0.0
        %644 = vmatpush.msra.mxu0 0.0
        %645 = vmatpush.msra.mxu0 0.0
        %646 = vmatpush.msra.mxu0 0.0
        %647 = vmatpush.msra.mxu0 0.0
        %648 = vmatpush.msra.mxu0 0.0
        %649 = vmatpush.msra.mxu0 0.0
        %v650 = vand.u32 %v164, 4294901760
        %651 = vmatpush.msra.mxu0 %v650
        %v652 = vand.u32 %v487, 4294901760
        %v653 = vsub.f32 %v487, %v652
        %v654 = vand.u32 %v653, 4294901760
        %v655 = vsub.f32 %v653, %v654
        %v656 = vand.u32 %v655, 4294901760
        %657 = vmatmul.f32.gmra.mxu0 %v656
        %v658 = vpop.f32.mrf.mxu0
        %v659 = vadd.f32 0.0, %v658
        %660 = vdwg.mxu0
        %661 = vmatpush.msra.mxu0 0.0
        %662 = vmatpush.msra.mxu0 0.0
        %663 = vmatpush.msra.mxu0 0.0
        %664 = vmatpush.msra.mxu0 0.0
        %665 = vmatpush.msra.mxu0 0.0
        %666 = vmatpush.msra.mxu0 0.0
        %667 = vmatpush.msra.mxu0 0.0
        %668 = vmatpush.msra.mxu0 0.0
        %669 = vmatpush.msra.mxu0 0.0
        %670 = vmatpush.msra.mxu0 0.0
        %671 = vmatpush.msra.mxu0 0.0
        %672 = vmatpush.msra.mxu0 0.0
        %673 = vmatpush.msra.mxu0 0.0
        %674 = vmatpush.msra.mxu0 0.0
        %675 = vmatpush.msra.mxu0 0.0
        %v676 = vand.u32 %v164, 4294901760
        %v677 = vsub.f32 %v164, %v676
        %v678 = vand.u32 %v677, 4294901760
        %v679 = vsub.f32 %v677, %v678
        %v680 = vand.u32 %v679, 4294901760
        %681 = vmatpush.msra.mxu0 %v680
        %v682 = vand.u32 %v487, 4294901760
        %683 = vmatmul.f32.gmra.mxu0 %v682
        %v684 = vpop.f32.mrf.mxu0
        %v685 = vadd.f32 %v659, %v684
        %686 = vdwg.mxu0
        %687 = vmatpush.msra.mxu0 0.0
        %688 = vmatpush.msra.mxu0 0.0
        %689 = vmatpush.msra.mxu0 0.0
        %690 = vmatpush.msra.mxu0 0.0
        %691 = vmatpush.msra.mxu0 0.0
        %692 = vmatpush.msra.mxu0 0.0
        %693 = vmatpush.msra.mxu0 0.0
        %694 = vmatpush.msra.mxu0 0.0
        %695 = vmatpush.msra.mxu0 0.0
        %696 = vmatpush.msra.mxu0 0.0
        %697 = vmatpush.msra.mxu0 0.0
        %698 = vmatpush.msra.mxu0 0.0
        %699 = vmatpush.msra.mxu0 0.0
        %700 = vmatpush.msra.mxu0 0.0
        %701 = vmatpush.msra.mxu0 0.0
        %v702 = vand.u32 %v164, 4294901760
        %v703 = vsub.f32 %v164, %v702
        %704 = vmatpush.msra.mxu0 %v703
        %v705 = vand.u32 %v487, 4294901760
        %v706 = vsub.f32 %v487, %v705
        %707 = vmatmul.f32.gmra.mxu0 %v706
        %v708 = vpop.f32.mrf.mxu0
        %v709 = vadd.f32 %v685, %v708
        %710 = vdwg.mxu0
        %711 = vmatpush.msra.mxu0 0.0
        %712 = vmatpush.msra.mxu0 0.0
        %713 = vmatpush.msra.mxu0 0.0
        %714 = vmatpush.msra.mxu0 0.0
        %715 = vmatpush.msra.mxu0 0.0
        %716 = vmatpush.msra.mxu0 0.0
        %717 = vmatpush.msra.mxu0 0.0
        %718 = vmatpush.msra.mxu0 0.0
        %719 = vmatpush.msra.mxu0 0.0
        %720 = vmatpush.msra.mxu0 0.0
        %721 = vmatpush.msra.mxu0 0.0
        %722 = vmatpush.msra.mxu0 0.0
        %723 = vmatpush.msra.mxu0 0.0
        %724 = vmatpush.msra.mxu0 0.0
        %725 = vmatpush.msra.mxu0 0.0
        %v726 = vand.u32 %v164, 4294901760
        %727 = vmatpush.msra.mxu0 %v726
        %v728 = vand.u32 %v487, 4294901760
        %v729 = vsub.f32 %v487, %v728
        %v730 = vand.u32 %v729, 4294901760
        %731 = vmatmul.f32.gmra.mxu0 %v730
        %v732 = vpop.f32.mrf.mxu0
        %v733 = vadd.f32 %v709, %v732
        %734 = vdwg.mxu0
        %735 = vmatpush.msra.mxu0 0.0
        %736 = vmatpush.msra.mxu0 0.0
        %737 = vmatpush.msra.mxu0 0.0
        %738 = vmatpush.msra.mxu0 0.0
        %739 = vmatpush.msra.mxu0 0.0
        %740 = vmatpush.msra.mxu0 0.0
        %741 = vmatpush.msra.mxu0 0.0
        %742 = vmatpush.msra.mxu0 0.0
        %743 = vmatpush.msra.mxu0 0.0
        %744 = vmatpush.msra.mxu0 0.0
        %745 = vmatpush.msra.mxu0 0.0
        %746 = vmatpush.msra.mxu0 0.0
        %747 = vmatpush.msra.mxu0 0.0
        %748 = vmatpush.msra.mxu0 0.0
        %749 = vmatpush.msra.mxu0 0.0
        %v750 = vand.u32 %v164, 4294901760
        %v751 = vsub.f32 %v164, %v750
        %v752 = vand.u32 %v751, 4294901760
        %753 = vmatpush.msra.mxu0 %v752
        %v754 = vand.u32 %v487, 4294901760
        %755 = vmatmul.f32.gmra.mxu0 %v754
        %v756 = vpop.f32.mrf.mxu0
        %v757 = vadd.f32 %v733, %v756
        %758 = vdwg.mxu0
        %759 = vmatpush.msra.mxu0 0.0
        %760 = vmatpush.msra.mxu0 0.0
        %761 = vmatpush.msra.mxu0 0.0
        %762 = vmatpush.msra.mxu0 0.0
        %763 = vmatpush.msra.mxu0 0.0
        %764 = vmatpush.msra.mxu0 0.0
        %765 = vmatpush.msra.mxu0 0.0
        %766 = vmatpush.msra.mxu0 0.0
        %767 = vmatpush.msra.mxu0 0.0
        %768 = vmatpush.msra.mxu0 0.0
        %769 = vmatpush.msra.mxu0 0.0
        %770 = vmatpush.msra.mxu0 0.0
        %771 = vmatpush.msra.mxu0 0.0
        %772 = vmatpush.msra.mxu0 0.0
        %773 = vmatpush.msra.mxu0 0.0
        %v774 = vand.u32 %v164, 4294901760
        %775 = vmatpush.msra.mxu0 %v774
        %v776 = vand.u32 %v487, 4294901760
        %777 = vmatmul.f32.gmra.mxu0 %v776
        %v778 = vpop.f32.mrf.mxu0
        %v779 = vadd.f32 %v757, %v778
        %780 = vdwg.mxu0
        %s781 = sld [smem:[#allocation2]]
        %v782 = vstv %s781
        %v783 = vmul.f32 %v782, %v633
        %v784 = vmul.f32 %v782, %v779
        %v785 = vadd.f32 %v783, %v163
        %v786 = vadd.f32 %v784, %v164
        %787 = vst [vmem:[%s162] sm:$0xff] %v785
        %788 = vst [vmem:[%s162 + $0x8] sm:$0xff] %v786
        %s789 = sand.u32 %s75, 1
        %s790 = scalar_lea.sflag [#allocation5], %s789
        %s791 = sand.u32 %s75, 1
        %s792 = smul.addr %s791, 16
        %s793 = scalar_lea.vmem [#allocation6], %s792
        // Predicated region
        $region33: #{tpu_custom_call.1} parent=27 // pred_check
          %p794 = pneg %p85
        $region34: #{tpu_custom_call.1} parent=27 // pred_check_branch
          %796 = sbr.rel (%p794) target = $region36
        $region35: #{tpu_custom_call.1} parent=27 // pred_region
          %798 = vsyncadd %s790, 0
          %s799 = smul.addr %s20, 2
          %s800 = smul.addr %s799, 8
          %s801 = scalar_lea.hbm %s2, %s800
          %s803 = sshll.u32 %s793, 4
          %s804 = int_to_ptr.vmem [resolvable:$true] %s803
          %s805 = sshll.u32 %s801, 4
          %s806 = int_to_ptr.hbm [resolvable:$true] %s805
          %808 = dma.vmem_to_hbm [thread:$0]  %s804, 256, %s806, %s790
        $region36: #{tpu_custom_call.1} parent=27 // pred_fallthru
          _
      $region28: #{tpu_custom_call.1} parent=5 // pred_fallthru
        _
      %p809 = scmp.le.s32.totalorder 2, %s15
      // Predicated region
      $region37: #{tpu_custom_call.1} parent=5 // pred_check
        %p810 = pneg %p809
      $region38: #{tpu_custom_call.1} parent=5 // pred_check_branch
        %812 = sbr.rel (%p810) target = $region40
      $region39: #{tpu_custom_call.1} parent=5 // pred_region
        %s813 = ssub.s32 %s15, 2
        // Predicated region
        $region41: #{tpu_custom_call.1} parent=39 // pred_check
          %p814 = pneg %p91
        $region42: #{tpu_custom_call.1} parent=39 // pred_check_branch
          %816 = sbr.rel (%p814) target = $region44
        $region43: #{tpu_custom_call.1} parent=39 // pred_region
          %s817 = sand.u32 %s76, 1
          %s818 = scalar_lea.sflag [#allocation5], %s817
          %s819 = sand.u32 %s76, 1
          %s820 = smul.addr %s819, 16
          %s821 = scalar_lea.vmem [#allocation6], %s820
          %823 = dma.done %s818, 256
        $region44: #{tpu_custom_call.1} parent=39 // pred_fallthru
          _
      $region40: #{tpu_custom_call.1} parent=5 // pred_fallthru
        _
    $region6: #{tpu_custom_call.1} parent=1 // loop_footer
      %s19 = sadd.s32 1, %s15
    $region7: #{tpu_custom_call.1} parent=1 // loop_footer_branch
      %14 = sbr.rel target = $region3
    $region8: #{tpu_custom_call.1} parent=1 // loop_exit
      _
    %824 = vsyncpa [#allocation4], 1
    %s825 = scalar_lea.sflag [#allocation4], 1
    %826 = vsyncpa %s825, 1
    %827 = vsyncpa [#allocation5], 1
    %s828 = scalar_lea.sflag [#allocation5], 1
    %829 = vsyncpa %s828, 1

</llo_original>
